<compile_context>
chip_gen: v5e
topology: v5e:2x2
jax: 0.10.0
libtpu: 0.0.40
codegen_flags: <defaults>
</compile_context>

<pallas_src>
import functools

import jax
import jax.numpy as jnp
import numpy as np
from jax.experimental import pallas as pl
from jax.experimental.pallas import tpu as pltpu


def _make_conv3d_sigmoid_kernel(kd, kh, kw, od, w_dim, hw_pad):
    """Kernel body: 1x1-channel valid Conv3d + bias + sigmoid on a lane-dense slab."""

    n_taps = kh * kw

    def kernel(w_ref, b_ref, x_ref, o_ref):
        # w_ref: SMEM (kd*kh*kw,) f32  -- conv weights, row-major (zd, zh, zw)
        # b_ref: SMEM (1,)        f32  -- conv bias
        # x_ref: VMEM (N, D, HWp) f32  -- input with (H, W) flattened onto the lane axis
        # o_ref: VMEM (N, OD, HWp) f32 -- lane-dense output slab (valid region sliced in wrapper)
        x = x_ref[...]

        # parts[zd] accumulates, at full depth, the weighted sum of the kh*kw in-plane
        # taps whose depth offset is zd. Each lane rotation is computed once and reused
        # for all kd depth offsets (keeps register pressure low: ~6 live slabs).
        parts = [None] * kd
        for zh in range(kh):
            for zw in range(kw):
                s = zh * w_dim + zw          # lane shift of this (zh, zw) tap
                t = zh * kw + zw
                # rolled[n, d, j] == x[n, d, j + s] for every lane j in the valid
                # output region (j + s <= H*W - 1, so no wrap-around there).
                r = x if s == 0 else pltpu.roll(x, hw_pad - s, axis=2)
                for zd in range(kd):
                    term = w_ref[zd * n_taps + t] * r
                    if parts[zd] is None:
                        # Fold the bias into the very first multiply-add of the zd == 0
                        # partial: no zero-fill, no standalone full-tensor bias add.
                        parts[zd] = (term + b_ref[0]) if zd == 0 else term
                    else:
                        parts[zd] = parts[zd] + term

        # Combine depth offsets: output depth od_i reads input depths od_i + zd.
        acc = parts[0][:, 0:od, :]
        for zd in range(1, kd):
            acc = acc + parts[zd][:, zd:zd + od, :]

        o_ref[...] = jax.nn.sigmoid(acc)

    return kernel


@functools.partial(jax.jit, static_argnames=("kernel_size",))
def template_matcher_3d(x, weight, bias, *, kernel_size):
    """x: (N, 1, D, H, W) f32; weight: (1, 1, kd, kh, kw); bias: (1,).

    Returns sigmoid(conv3d_valid(x)).flatten(), matching the PyTorch module's forward().
    """
    kd, kh, kw = kernel_size
    n, c, d, h, w = x.shape
    assert c == 1
    od, oh, ow = d - kd + 1, h - kh + 1, w - kw + 1

    hw = h * w
    hw_pad = ((hw + 127) // 128) * 128           # lane-dense last axis (multiple of 128)

    x_slab = x.reshape(n, d, hw).astype(jnp.float32)
    if hw_pad != hw:
        x_slab = jnp.pad(x_slab, ((0, 0), (0, 0), (0, hw_pad - hw)))

    w_flat = weight.reshape(kd * kh * kw).astype(jnp.float32)
    b_flat = bias.reshape(1).astype(jnp.float32)

    kernel = _make_conv3d_sigmoid_kernel(kd, kh, kw, od, w, hw_pad)

    n_out = n * od * oh * ow
    cost = pl.CostEstimate(
        flops=2 * n_out * kd * kh * kw,
        transcendentals=n_out,                                   # sigmoid
        bytes_accessed=4 * (x_slab.size + n * od * hw_pad + w_flat.size + 1),
    )

    # Single grid step: the whole problem fits one VMEM block, and a per-batch grid
    # would only add ~0.35 us/step of fixed overhead on single-TC chips (v5e/v6e).
    # TODO(synk): if N/D/H/W grow, tile the batch with grid=(N,) and
    # dimension_semantics=("parallel",) so v7x's 2 TensorCores split it, and set
    # vmem_limit_bytes explicitly (v7x has 64 MiB VMEM vs 128 MiB on v5e/v6e).
    out_slab = pl.pallas_call(
        kernel,
        out_shape=jax.ShapeDtypeStruct((n, od, hw_pad), jnp.float32),
        in_specs=[
            pl.BlockSpec(memory_space=pltpu.MemorySpace.SMEM),   # conv weights (scalars)
            pl.BlockSpec(memory_space=pltpu.MemorySpace.SMEM),   # conv bias
            pl.BlockSpec(memory_space=pltpu.MemorySpace.VMEM),   # input slab
        ],
        out_specs=pl.BlockSpec(memory_space=pltpu.MemorySpace.VMEM),
        cost_estimate=cost,
    )(w_flat, b_flat, x_slab)

    # Valid output lanes are j = oh_i * W + ow_i with oh_i < OH and ow_i < OW.
    out = out_slab[:, :, :hw].reshape(n, od, h, w)[:, :, :oh, :ow]
    return out.reshape(-1)


def _reference(x, weight, bias):
    """Pure-JAX reference (cross-correlation, like torch Conv3d), flattened."""
    y = jax.lax.conv_general_dilated(
        x, weight,
        window_strides=(1, 1, 1),
        padding="VALID",
        dimension_numbers=("NCDHW", "OIDHW", "NCDHW"),
    )
    return jax.nn.sigmoid(y + bias.reshape(1, 1, 1, 1, 1)).reshape(-1)


if __name__ == "__main__":
    # Template kernel (d=3, h=4, w=4); input batch=2, 1 channel, volume 8x16x16.
    KD, KH, KW = 3, 4, 4
    N, D, H, W = 2, 8, 16, 16

    key = jax.random.PRNGKey(0)
    kx, kw_, kb = jax.random.split(key, 3)

    x = jax.random.normal(kx, (N, 1, D, H, W), dtype=jnp.float32)
    # Deterministic synthetic Conv3d params (uniform, like torch's fan-in bound).
    fan_in = KD * KH * KW
    bound = 1.0 / np.sqrt(fan_in)
    weight = jax.random.uniform(kw_, (1, 1, KD, KH, KW), jnp.float32, -bound, bound)
    bias = jax.random.uniform(kb, (1,), jnp.float32, -bound, bound)

    out = template_matcher_3d(x, weight, bias, kernel_size=(KD, KH, KW))
    out = jax.block_until_ready(out)

    ref = jax.block_until_ready(_reference(x, weight, bias))
    assert out.shape == (N * (D - KD + 1) * (H - KH + 1) * (W - KW + 1),)
    np.testing.assert_allclose(np.asarray(out), np.asarray(ref), rtol=1e-5, atol=1e-5)

    print("KERNEL_OK")
</pallas_src>

<mosaic_0001>
module attributes {stable_mosaic.version = 11 : i64} {
  func.func @kernel(%arg0: memref<48xf32, #tpu.memory_space<smem>>, %arg1: memref<1xf32, #tpu.memory_space<smem>>, %arg2: memref<2x8x256xf32, #tpu.memory_space<vmem>>, %arg3: memref<2x6x256xf32, #tpu.memory_space<vmem>>) attributes {dimension_semantics = [], scalar_prefetch = 0 : i64, scratch_operands = 0 : i64, tpu.core_type = #tpu.core_type<tc>} {
    %c0 = arith.constant 0 : index
    %c0_0 = arith.constant 0 : index
    %c0_1 = arith.constant 0 : index
    %0 = vector.load %arg2[%c0, %c0_0, %c0_1] : memref<2x8x256xf32, #tpu.memory_space<vmem>>, vector<2x8x256xf32>
    %c0_2 = arith.constant 0 : index
    %1 = memref.load %arg0[%c0_2] : memref<48xf32, #tpu.memory_space<smem>>
    %2 = vector.broadcast %1 : f32 to vector<2x8x256xf32>
    %3 = arith.mulf %2, %0 : vector<2x8x256xf32>
    %c0_3 = arith.constant 0 : index
    %4 = memref.load %arg1[%c0_3] : memref<1xf32, #tpu.memory_space<smem>>
    %5 = vector.broadcast %4 : f32 to vector<2x8x256xf32>
    %6 = arith.addf %3, %5 : vector<2x8x256xf32>
    %c16 = arith.constant 16 : index
    %7 = memref.load %arg0[%c16] : memref<48xf32, #tpu.memory_space<smem>>
    %8 = vector.broadcast %7 : f32 to vector<2x8x256xf32>
    %9 = arith.mulf %8, %0 : vector<2x8x256xf32>
    %c32 = arith.constant 32 : index
    %10 = memref.load %arg0[%c32] : memref<48xf32, #tpu.memory_space<smem>>
    %11 = vector.broadcast %10 : f32 to vector<2x8x256xf32>
    %12 = arith.mulf %11, %0 : vector<2x8x256xf32>
    %c255_i32 = arith.constant 255 : i32
    %13 = tpu.dynamic_rotate %0 by %c255_i32 dim 2 : vector<2x8x256xf32>, i32 -> vector<2x8x256xf32>
    %c1 = arith.constant 1 : index
    %14 = memref.load %arg0[%c1] : memref<48xf32, #tpu.memory_space<smem>>
    %15 = vector.broadcast %14 : f32 to vector<2x8x256xf32>
    %16 = arith.mulf %15, %13 : vector<2x8x256xf32>
    %17 = arith.addf %6, %16 : vector<2x8x256xf32>
    %c17 = arith.constant 17 : index
    %18 = memref.load %arg0[%c17] : memref<48xf32, #tpu.memory_space<smem>>
    %19 = vector.broadcast %18 : f32 to vector<2x8x256xf32>
    %20 = arith.mulf %19, %13 : vector<2x8x256xf32>
    %21 = arith.addf %9, %20 : vector<2x8x256xf32>
    %c33 = arith.constant 33 : index
    %22 = memref.load %arg0[%c33] : memref<48xf32, #tpu.memory_space<smem>>
    %23 = vector.broadcast %22 : f32 to vector<2x8x256xf32>
    %24 = arith.mulf %23, %13 : vector<2x8x256xf32>
    %25 = arith.addf %12, %24 : vector<2x8x256xf32>
    %c254_i32 = arith.constant 254 : i32
    %26 = tpu.dynamic_rotate %0 by %c254_i32 dim 2 : vector<2x8x256xf32>, i32 -> vector<2x8x256xf32>
    %c2 = arith.constant 2 : index
    %27 = memref.load %arg0[%c2] : memref<48xf32, #tpu.memory_space<smem>>
    %28 = vector.broadcast %27 : f32 to vector<2x8x256xf32>
    %29 = arith.mulf %28, %26 : vector<2x8x256xf32>
    %30 = arith.addf %17, %29 : vector<2x8x256xf32>
    %c18 = arith.constant 18 : index
    %31 = memref.load %arg0[%c18] : memref<48xf32, #tpu.memory_space<smem>>
    %32 = vector.broadcast %31 : f32 to vector<2x8x256xf32>
    %33 = arith.mulf %32, %26 : vector<2x8x256xf32>
    %34 = arith.addf %21, %33 : vector<2x8x256xf32>
    %c34 = arith.constant 34 : index
    %35 = memref.load %arg0[%c34] : memref<48xf32, #tpu.memory_space<smem>>
    %36 = vector.broadcast %35 : f32 to vector<2x8x256xf32>
    %37 = arith.mulf %36, %26 : vector<2x8x256xf32>
    %38 = arith.addf %25, %37 : vector<2x8x256xf32>
    %c253_i32 = arith.constant 253 : i32
    %39 = tpu.dynamic_rotate %0 by %c253_i32 dim 2 : vector<2x8x256xf32>, i32 -> vector<2x8x256xf32>
    %c3 = arith.constant 3 : index
    %40 = memref.load %arg0[%c3] : memref<48xf32, #tpu.memory_space<smem>>
    %41 = vector.broadcast %40 : f32 to vector<2x8x256xf32>
    %42 = arith.mulf %41, %39 : vector<2x8x256xf32>
    %43 = arith.addf %30, %42 : vector<2x8x256xf32>
    %c19 = arith.constant 19 : index
    %44 = memref.load %arg0[%c19] : memref<48xf32, #tpu.memory_space<smem>>
    %45 = vector.broadcast %44 : f32 to vector<2x8x256xf32>
    %46 = arith.mulf %45, %39 : vector<2x8x256xf32>
    %47 = arith.addf %34, %46 : vector<2x8x256xf32>
    %c35 = arith.constant 35 : index
    %48 = memref.load %arg0[%c35] : memref<48xf32, #tpu.memory_space<smem>>
    %49 = vector.broadcast %48 : f32 to vector<2x8x256xf32>
    %50 = arith.mulf %49, %39 : vector<2x8x256xf32>
    %51 = arith.addf %38, %50 : vector<2x8x256xf32>
    %c240_i32 = arith.constant 240 : i32
    %52 = tpu.dynamic_rotate %0 by %c240_i32 dim 2 : vector<2x8x256xf32>, i32 -> vector<2x8x256xf32>
    %c4 = arith.constant 4 : index
    %53 = memref.load %arg0[%c4] : memref<48xf32, #tpu.memory_space<smem>>
    %54 = vector.broadcast %53 : f32 to vector<2x8x256xf32>
    %55 = arith.mulf %54, %52 : vector<2x8x256xf32>
    %56 = arith.addf %43, %55 : vector<2x8x256xf32>
    %c20 = arith.constant 20 : index
    %57 = memref.load %arg0[%c20] : memref<48xf32, #tpu.memory_space<smem>>
    %58 = vector.broadcast %57 : f32 to vector<2x8x256xf32>
    %59 = arith.mulf %58, %52 : vector<2x8x256xf32>
    %60 = arith.addf %47, %59 : vector<2x8x256xf32>
    %c36 = arith.constant 36 : index
    %61 = memref.load %arg0[%c36] : memref<48xf32, #tpu.memory_space<smem>>
    %62 = vector.broadcast %61 : f32 to vector<2x8x256xf32>
    %63 = arith.mulf %62, %52 : vector<2x8x256xf32>
    %64 = arith.addf %51, %63 : vector<2x8x256xf32>
    %c239_i32 = arith.constant 239 : i32
    %65 = tpu.dynamic_rotate %0 by %c239_i32 dim 2 : vector<2x8x256xf32>, i32 -> vector<2x8x256xf32>
    %c5 = arith.constant 5 : index
    %66 = memref.load %arg0[%c5] : memref<48xf32, #tpu.memory_space<smem>>
    %67 = vector.broadcast %66 : f32 to vector<2x8x256xf32>
    %68 = arith.mulf %67, %65 : vector<2x8x256xf32>
    %69 = arith.addf %56, %68 : vector<2x8x256xf32>
    %c21 = arith.constant 21 : index
    %70 = memref.load %arg0[%c21] : memref<48xf32, #tpu.memory_space<smem>>
    %71 = vector.broadcast %70 : f32 to vector<2x8x256xf32>
    %72 = arith.mulf %71, %65 : vector<2x8x256xf32>
    %73 = arith.addf %60, %72 : vector<2x8x256xf32>
    %c37 = arith.constant 37 : index
    %74 = memref.load %arg0[%c37] : memref<48xf32, #tpu.memory_space<smem>>
    %75 = vector.broadcast %74 : f32 to vector<2x8x256xf32>
    %76 = arith.mulf %75, %65 : vector<2x8x256xf32>
    %77 = arith.addf %64, %76 : vector<2x8x256xf32>
    %c238_i32 = arith.constant 238 : i32
    %78 = tpu.dynamic_rotate %0 by %c238_i32 dim 2 : vector<2x8x256xf32>, i32 -> vector<2x8x256xf32>
    %c6 = arith.constant 6 : index
    %79 = memref.load %arg0[%c6] : memref<48xf32, #tpu.memory_space<smem>>
    %80 = vector.broadcast %79 : f32 to vector<2x8x256xf32>
    %81 = arith.mulf %80, %78 : vector<2x8x256xf32>
    %82 = arith.addf %69, %81 : vector<2x8x256xf32>
    %c22 = arith.constant 22 : index
    %83 = memref.load %arg0[%c22] : memref<48xf32, #tpu.memory_space<smem>>
    %84 = vector.broadcast %83 : f32 to vector<2x8x256xf32>
    %85 = arith.mulf %84, %78 : vector<2x8x256xf32>
    %86 = arith.addf %73, %85 : vector<2x8x256xf32>
    %c38 = arith.constant 38 : index
    %87 = memref.load %arg0[%c38] : memref<48xf32, #tpu.memory_space<smem>>
    %88 = vector.broadcast %87 : f32 to vector<2x8x256xf32>
    %89 = arith.mulf %88, %78 : vector<2x8x256xf32>
    %90 = arith.addf %77, %89 : vector<2x8x256xf32>
    %c237_i32 = arith.constant 237 : i32
    %91 = tpu.dynamic_rotate %0 by %c237_i32 dim 2 : vector<2x8x256xf32>, i32 -> vector<2x8x256xf32>
    %c7 = arith.constant 7 : index
    %92 = memref.load %arg0[%c7] : memref<48xf32, #tpu.memory_space<smem>>
    %93 = vector.broadcast %92 : f32 to vector<2x8x256xf32>
    %94 = arith.mulf %93, %91 : vector<2x8x256xf32>
    %95 = arith.addf %82, %94 : vector<2x8x256xf32>
    %c23 = arith.constant 23 : index
    %96 = memref.load %arg0[%c23] : memref<48xf32, #tpu.memory_space<smem>>
    %97 = vector.broadcast %96 : f32 to vector<2x8x256xf32>
    %98 = arith.mulf %97, %91 : vector<2x8x256xf32>
    %99 = arith.addf %86, %98 : vector<2x8x256xf32>
    %c39 = arith.constant 39 : index
    %100 = memref.load %arg0[%c39] : memref<48xf32, #tpu.memory_space<smem>>
    %101 = vector.broadcast %100 : f32 to vector<2x8x256xf32>
    %102 = arith.mulf %101, %91 : vector<2x8x256xf32>
    %103 = arith.addf %90, %102 : vector<2x8x256xf32>
    %c224_i32 = arith.constant 224 : i32
    %104 = tpu.dynamic_rotate %0 by %c224_i32 dim 2 : vector<2x8x256xf32>, i32 -> vector<2x8x256xf32>
    %c8 = arith.constant 8 : index
    %105 = memref.load %arg0[%c8] : memref<48xf32, #tpu.memory_space<smem>>
    %106 = vector.broadcast %105 : f32 to vector<2x8x256xf32>
    %107 = arith.mulf %106, %104 : vector<2x8x256xf32>
    %108 = arith.addf %95, %107 : vector<2x8x256xf32>
    %c24 = arith.constant 24 : index
    %109 = memref.load %arg0[%c24] : memref<48xf32, #tpu.memory_space<smem>>
    %110 = vector.broadcast %109 : f32 to vector<2x8x256xf32>
    %111 = arith.mulf %110, %104 : vector<2x8x256xf32>
    %112 = arith.addf %99, %111 : vector<2x8x256xf32>
    %c40 = arith.constant 40 : index
    %113 = memref.load %arg0[%c40] : memref<48xf32, #tpu.memory_space<smem>>
    %114 = vector.broadcast %113 : f32 to vector<2x8x256xf32>
    %115 = arith.mulf %114, %104 : vector<2x8x256xf32>
    %116 = arith.addf %103, %115 : vector<2x8x256xf32>
    %c223_i32 = arith.constant 223 : i32
    %117 = tpu.dynamic_rotate %0 by %c223_i32 dim 2 : vector<2x8x256xf32>, i32 -> vector<2x8x256xf32>
    %c9 = arith.constant 9 : index
    %118 = memref.load %arg0[%c9] : memref<48xf32, #tpu.memory_space<smem>>
    %119 = vector.broadcast %118 : f32 to vector<2x8x256xf32>
    %120 = arith.mulf %119, %117 : vector<2x8x256xf32>
    %121 = arith.addf %108, %120 : vector<2x8x256xf32>
    %c25 = arith.constant 25 : index
    %122 = memref.load %arg0[%c25] : memref<48xf32, #tpu.memory_space<smem>>
    %123 = vector.broadcast %122 : f32 to vector<2x8x256xf32>
    %124 = arith.mulf %123, %117 : vector<2x8x256xf32>
    %125 = arith.addf %112, %124 : vector<2x8x256xf32>
    %c41 = arith.constant 41 : index
    %126 = memref.load %arg0[%c41] : memref<48xf32, #tpu.memory_space<smem>>
    %127 = vector.broadcast %126 : f32 to vector<2x8x256xf32>
    %128 = arith.mulf %127, %117 : vector<2x8x256xf32>
    %129 = arith.addf %116, %128 : vector<2x8x256xf32>
    %c222_i32 = arith.constant 222 : i32
    %130 = tpu.dynamic_rotate %0 by %c222_i32 dim 2 : vector<2x8x256xf32>, i32 -> vector<2x8x256xf32>
    %c10 = arith.constant 10 : index
    %131 = memref.load %arg0[%c10] : memref<48xf32, #tpu.memory_space<smem>>
    %132 = vector.broadcast %131 : f32 to vector<2x8x256xf32>
    %133 = arith.mulf %132, %130 : vector<2x8x256xf32>
    %134 = arith.addf %121, %133 : vector<2x8x256xf32>
    %c26 = arith.constant 26 : index
    %135 = memref.load %arg0[%c26] : memref<48xf32, #tpu.memory_space<smem>>
    %136 = vector.broadcast %135 : f32 to vector<2x8x256xf32>
    %137 = arith.mulf %136, %130 : vector<2x8x256xf32>
    %138 = arith.addf %125, %137 : vector<2x8x256xf32>
    %c42 = arith.constant 42 : index
    %139 = memref.load %arg0[%c42] : memref<48xf32, #tpu.memory_space<smem>>
    %140 = vector.broadcast %139 : f32 to vector<2x8x256xf32>
    %141 = arith.mulf %140, %130 : vector<2x8x256xf32>
    %142 = arith.addf %129, %141 : vector<2x8x256xf32>
    %c221_i32 = arith.constant 221 : i32
    %143 = tpu.dynamic_rotate %0 by %c221_i32 dim 2 : vector<2x8x256xf32>, i32 -> vector<2x8x256xf32>
    %c11 = arith.constant 11 : index
    %144 = memref.load %arg0[%c11] : memref<48xf32, #tpu.memory_space<smem>>
    %145 = vector.broadcast %144 : f32 to vector<2x8x256xf32>
    %146 = arith.mulf %145, %143 : vector<2x8x256xf32>
    %147 = arith.addf %134, %146 : vector<2x8x256xf32>
    %c27 = arith.constant 27 : index
    %148 = memref.load %arg0[%c27] : memref<48xf32, #tpu.memory_space<smem>>
    %149 = vector.broadcast %148 : f32 to vector<2x8x256xf32>
    %150 = arith.mulf %149, %143 : vector<2x8x256xf32>
    %151 = arith.addf %138, %150 : vector<2x8x256xf32>
    %c43 = arith.constant 43 : index
    %152 = memref.load %arg0[%c43] : memref<48xf32, #tpu.memory_space<smem>>
    %153 = vector.broadcast %152 : f32 to vector<2x8x256xf32>
    %154 = arith.mulf %153, %143 : vector<2x8x256xf32>
    %155 = arith.addf %142, %154 : vector<2x8x256xf32>
    %c208_i32 = arith.constant 208 : i32
    %156 = tpu.dynamic_rotate %0 by %c208_i32 dim 2 : vector<2x8x256xf32>, i32 -> vector<2x8x256xf32>
    %c12 = arith.constant 12 : index
    %157 = memref.load %arg0[%c12] : memref<48xf32, #tpu.memory_space<smem>>
    %158 = vector.broadcast %157 : f32 to vector<2x8x256xf32>
    %159 = arith.mulf %158, %156 : vector<2x8x256xf32>
    %160 = arith.addf %147, %159 : vector<2x8x256xf32>
    %c28 = arith.constant 28 : index
    %161 = memref.load %arg0[%c28] : memref<48xf32, #tpu.memory_space<smem>>
    %162 = vector.broadcast %161 : f32 to vector<2x8x256xf32>
    %163 = arith.mulf %162, %156 : vector<2x8x256xf32>
    %164 = arith.addf %151, %163 : vector<2x8x256xf32>
    %c44 = arith.constant 44 : index
    %165 = memref.load %arg0[%c44] : memref<48xf32, #tpu.memory_space<smem>>
    %166 = vector.broadcast %165 : f32 to vector<2x8x256xf32>
    %167 = arith.mulf %166, %156 : vector<2x8x256xf32>
    %168 = arith.addf %155, %167 : vector<2x8x256xf32>
    %c207_i32 = arith.constant 207 : i32
    %169 = tpu.dynamic_rotate %0 by %c207_i32 dim 2 : vector<2x8x256xf32>, i32 -> vector<2x8x256xf32>
    %c13 = arith.constant 13 : index
    %170 = memref.load %arg0[%c13] : memref<48xf32, #tpu.memory_space<smem>>
    %171 = vector.broadcast %170 : f32 to vector<2x8x256xf32>
    %172 = arith.mulf %171, %169 : vector<2x8x256xf32>
    %173 = arith.addf %160, %172 : vector<2x8x256xf32>
    %c29 = arith.constant 29 : index
    %174 = memref.load %arg0[%c29] : memref<48xf32, #tpu.memory_space<smem>>
    %175 = vector.broadcast %174 : f32 to vector<2x8x256xf32>
    %176 = arith.mulf %175, %169 : vector<2x8x256xf32>
    %177 = arith.addf %164, %176 : vector<2x8x256xf32>
    %c45 = arith.constant 45 : index
    %178 = memref.load %arg0[%c45] : memref<48xf32, #tpu.memory_space<smem>>
    %179 = vector.broadcast %178 : f32 to vector<2x8x256xf32>
    %180 = arith.mulf %179, %169 : vector<2x8x256xf32>
    %181 = arith.addf %168, %180 : vector<2x8x256xf32>
    %c206_i32 = arith.constant 206 : i32
    %182 = tpu.dynamic_rotate %0 by %c206_i32 dim 2 : vector<2x8x256xf32>, i32 -> vector<2x8x256xf32>
    %c14 = arith.constant 14 : index
    %183 = memref.load %arg0[%c14] : memref<48xf32, #tpu.memory_space<smem>>
    %184 = vector.broadcast %183 : f32 to vector<2x8x256xf32>
    %185 = arith.mulf %184, %182 : vector<2x8x256xf32>
    %186 = arith.addf %173, %185 : vector<2x8x256xf32>
    %c30 = arith.constant 30 : index
    %187 = memref.load %arg0[%c30] : memref<48xf32, #tpu.memory_space<smem>>
    %188 = vector.broadcast %187 : f32 to vector<2x8x256xf32>
    %189 = arith.mulf %188, %182 : vector<2x8x256xf32>
    %190 = arith.addf %177, %189 : vector<2x8x256xf32>
    %c46 = arith.constant 46 : index
    %191 = memref.load %arg0[%c46] : memref<48xf32, #tpu.memory_space<smem>>
    %192 = vector.broadcast %191 : f32 to vector<2x8x256xf32>
    %193 = arith.mulf %192, %182 : vector<2x8x256xf32>
    %194 = arith.addf %181, %193 : vector<2x8x256xf32>
    %c205_i32 = arith.constant 205 : i32
    %195 = tpu.dynamic_rotate %0 by %c205_i32 dim 2 : vector<2x8x256xf32>, i32 -> vector<2x8x256xf32>
    %c15 = arith.constant 15 : index
    %196 = memref.load %arg0[%c15] : memref<48xf32, #tpu.memory_space<smem>>
    %197 = vector.broadcast %196 : f32 to vector<2x8x256xf32>
    %198 = arith.mulf %197, %195 : vector<2x8x256xf32>
    %199 = arith.addf %186, %198 : vector<2x8x256xf32>
    %c31 = arith.constant 31 : index
    %200 = memref.load %arg0[%c31] : memref<48xf32, #tpu.memory_space<smem>>
    %201 = vector.broadcast %200 : f32 to vector<2x8x256xf32>
    %202 = arith.mulf %201, %195 : vector<2x8x256xf32>
    %203 = arith.addf %190, %202 : vector<2x8x256xf32>
    %c47 = arith.constant 47 : index
    %204 = memref.load %arg0[%c47] : memref<48xf32, #tpu.memory_space<smem>>
    %205 = vector.broadcast %204 : f32 to vector<2x8x256xf32>
    %206 = arith.mulf %205, %195 : vector<2x8x256xf32>
    %207 = arith.addf %194, %206 : vector<2x8x256xf32>
    %208 = vector.extract_strided_slice %199 {offsets = [0, 0, 0], sizes = [2, 6, 256], strides = [1, 1, 1]} : vector<2x8x256xf32> to vector<2x6x256xf32>
    %209 = vector.extract_strided_slice %203 {offsets = [0, 1, 0], sizes = [2, 6, 256], strides = [1, 1, 1]} : vector<2x8x256xf32> to vector<2x6x256xf32>
    %210 = arith.addf %208, %209 : vector<2x6x256xf32>
    %211 = vector.extract_strided_slice %207 {offsets = [0, 2, 0], sizes = [2, 6, 256], strides = [1, 1, 1]} : vector<2x8x256xf32> to vector<2x6x256xf32>
    %212 = arith.addf %210, %211 : vector<2x6x256xf32>
    %213 = arith.negf %212 : vector<2x6x256xf32>
    %214 = math.exp %213 : vector<2x6x256xf32>
    %cst = arith.constant 1.000000e+00 : f32
    %215 = vector.broadcast %cst : f32 to vector<2x6x256xf32>
    %216 = arith.addf %215, %214 : vector<2x6x256xf32>
    %217 = arith.divf %215, %216 : vector<2x6x256xf32>
    %c0_4 = arith.constant 0 : index
    %c0_5 = arith.constant 0 : index
    %c0_6 = arith.constant 0 : index
    %218 = vector.load %arg3[%c0_4, %c0_5, %c0_6] : memref<2x6x256xf32, #tpu.memory_space<vmem>>, vector<2x6x256xf32>
    tpu.vector_store %arg3[%c0_4, %c0_5, %c0_6], %217 {strides = array<i32>} : memref<2x6x256xf32, #tpu.memory_space<vmem>>, vector<2x6x256xf32>,
    return
  }
}

</mosaic_0001>

<llo_original>
// kernel: template_matcher_3d.1
$region0: #{template_matcher_3d.1}
  #allocation0 [shape = 'u32[]', space=smem, size = 0x4, offset = 0x4, fixed_abs, tag = 'smem constant byte address 0x4 - core index']
  #allocation1 [shape = 'u32[72,128]{1,0:T(1,128)}', space=vmem, size = 0x9000, scoped, tag = 'internal scratch']
  #allocation2 [shape = 'f32[1]{0:T(128)S(6)}', space=smem, size = 0x200, scoped, tag = 'scoped memory for template_matcher_3d.1']
  %s0 = inlined_call_operand.vmem [shape: f32[48], index: 0, kind: input, shape index: {}]
  %s1 = inlined_call_operand.<no memory space> [shape: f32[1], index: 1, kind: input, shape index: {}]
  %s2 = inlined_call_operand.vmem [shape: f32[2,8,256], index: 2, kind: input, shape index: {}]
  %s3 = inlined_call_operand.vmem [shape: f32[2,6,256], index: 3, kind: output, shape index: {}]
  %s4 = sld [smem:[#allocation0]]
  $region26: #{template_matcher_3d.1} parent=0
    _
  %s6 = ssub.s32 1, %s4
  %s7 = scalar_select 0, %s6, %s4
  %8 = sst [smem:[#allocation2]] %s1
  $region1: #{template_matcher_3d.1} parent=0
    #allocation3 [shape = 'u8[512]{0}', space=smem, size = 0x200, scoped, tag = 'input window, operand 0, single buffered']
    #allocation4 [shape = 's32[1]{0}', space=sflag, size = 0x4, scoped, tag = 'scoped memory for template_matcher_3d.1']
    %9 = vsyncpa [#allocation4], 0
    // Predicated region
    $region2: #{template_matcher_3d.1} parent=1 // pred_check
      _
    $region3: #{template_matcher_3d.1} parent=1 // pred_check_branch
      %11 = sbr.rel (0) target = $region5
    $region4: #{template_matcher_3d.1} parent=1 // pred_region
      %13 = vsyncadd [#allocation4], 0
      %s15 = sshll.u32 %s0, 4
      %s16 = int_to_ptr.vmem [resolvable:$true] %s15
      %18 = dma.vmem_to_smem %s16, 16, [#allocation3], [#allocation4]
    $region5: #{template_matcher_3d.1} parent=1 // pred_fallthru
      _
    // Predicated region
    $region6: #{template_matcher_3d.1} parent=1 // pred_check
      _
    $region7: #{template_matcher_3d.1} parent=1 // pred_check_branch
      %20 = sbr.rel (0) target = $region9
    $region8: #{template_matcher_3d.1} parent=1 // pred_region
      _
    $region9: #{template_matcher_3d.1} parent=1 // pred_fallthru
      _
    // Predicated region
    $region10: #{template_matcher_3d.1} parent=1 // pred_check
      _
    $region11: #{template_matcher_3d.1} parent=1 // pred_check_branch
      %22 = sbr.rel (0) target = $region13
    $region12: #{template_matcher_3d.1} parent=1 // pred_region
      _
    $region13: #{template_matcher_3d.1} parent=1 // pred_fallthru
      _
    // Predicated region
    $region14: #{template_matcher_3d.1} parent=1 // pred_check
      _
    $region15: #{template_matcher_3d.1} parent=1 // pred_check_branch
      %24 = sbr.rel (0) target = $region17
    $region16: #{template_matcher_3d.1} parent=1 // pred_region
      %26 = dma.done [#allocation4], 16
    $region17: #{template_matcher_3d.1} parent=1 // pred_fallthru
      _
    %27 = sfence
    %v28 = vld [vmem:[%s2] sm:$0xff]
    %v29 = vld [vmem:[%s2 + $0x8] sm:$0xff]
    %v30 = vld [vmem:[%s2 + $0x10] sm:$0xff]
    %v31 = vld [vmem:[%s2 + $0x18] sm:$0xff]
    %s32 = sld [smem:[#allocation3]]
    %v33 = vstv %s32
    %v34 = vmul.f32 %v33, %v28
    %v35 = vmul.f32 %v33, %v29
    %v36 = vmul.f32 %v33, %v30
    %v37 = vmul.f32 %v33, %v31
    %s38 = sld [smem:[#allocation2]]
    %v39 = vstv %s38
    %v40 = vadd.f32 %v34, %v39
    %v41 = vadd.f32 %v35, %v39
    %v42 = vadd.f32 %v36, %v39
    %v43 = vadd.f32 %v37, %v39
    %s44 = sld [smem:[#allocation3 + $0x10]]
    %v45 = vstv %s44
    %v46 = vmul.f32 %v45, %v28
    %v47 = vmul.f32 %v45, %v29
    %v48 = vmul.f32 %v45, %v30
    %v49 = vmul.f32 %v45, %v31
    %s50 = sld [smem:[#allocation3 + $0x20]]
    %v51 = vstv %s50
    %v52 = vmul.f32 %v51, %v28
    %v53 = vmul.f32 %v51, %v29
    %v54 = vmul.f32 %v51, %v30
    %v55 = vmul.f32 %v51, %v31
    %56 = vrot.lane.b32.xlu0 %v28, 127
    %v57 = vpop.permute.xlu0 %56
    %58 = vrot.lane.b32.xlu0 %v30, 127
    %v59 = vpop.permute.xlu0 %58
    %60 = vrot.lane.b32.xlu0 %v29, 127
    %v61 = vpop.permute.xlu0 %60
    %62 = vrot.lane.b32.xlu0 %v31, 127
    %v63 = vpop.permute.xlu0 %62
    %v64 = vlaneseq
    %v65 = vand.u32 %v64, 127
    %vm66 = vcmp.lt.s32.totalorder %v65, 127
    %v67 = vsel %vm66, %v57, %v61
    %v68 = vsel %vm66, %v59, %v63
    %v69 = vsel %vm66, %v61, %v57
    %v70 = vsel %vm66, %v63, %v59
    %s71 = sld [smem:[#allocation3 + $0x1]]
    %v72 = vstv %s71
    %v73 = vmul.f32 %v72, %v67
    %v74 = vmul.f32 %v72, %v69
    %v75 = vmul.f32 %v72, %v68
    %v76 = vmul.f32 %v72, %v70
    %v77 = vadd.f32 %v40, %v73
    %v78 = vadd.f32 %v41, %v74
    %v79 = vadd.f32 %v42, %v75
    %v80 = vadd.f32 %v43, %v76
    %s81 = sld [smem:[#allocation3 + $0x11]]
    %v82 = vstv %s81
    %v83 = vmul.f32 %v82, %v67
    %v84 = vmul.f32 %v82, %v69
    %v85 = vmul.f32 %v82, %v68
    %v86 = vmul.f32 %v82, %v70
    %v87 = vadd.f32 %v46, %v83
    %v88 = vadd.f32 %v47, %v84
    %v89 = vadd.f32 %v48, %v85
    %v90 = vadd.f32 %v49, %v86
    %s91 = sld [smem:[#allocation3 + $0x21]]
    %v92 = vstv %s91
    %v93 = vmul.f32 %v92, %v67
    %v94 = vmul.f32 %v92, %v69
    %v95 = vmul.f32 %v92, %v68
    %v96 = vmul.f32 %v92, %v70
    %v97 = vadd.f32 %v52, %v93
    %v98 = vadd.f32 %v53, %v94
    %v99 = vadd.f32 %v54, %v95
    %v100 = vadd.f32 %v55, %v96
    %101 = vrot.lane.b32.xlu0 %v28, 126
    %v102 = vpop.permute.xlu0 %101
    %103 = vrot.lane.b32.xlu0 %v30, 126
    %v104 = vpop.permute.xlu0 %103
    %105 = vrot.lane.b32.xlu0 %v29, 126
    %v106 = vpop.permute.xlu0 %105
    %107 = vrot.lane.b32.xlu0 %v31, 126
    %v108 = vpop.permute.xlu0 %107
    %vm109 = vcmp.lt.s32.totalorder %v65, 126
    %v110 = vsel %vm109, %v102, %v106
    %v111 = vsel %vm109, %v104, %v108
    %v112 = vsel %vm109, %v106, %v102
    %v113 = vsel %vm109, %v108, %v104
    %s114 = sld [smem:[#allocation3 + $0x2]]
    %v115 = vstv %s114
    %v116 = vmul.f32 %v115, %v110
    %v117 = vmul.f32 %v115, %v112
    %v118 = vmul.f32 %v115, %v111
    %v119 = vmul.f32 %v115, %v113
    %v120 = vadd.f32 %v77, %v116
    %v121 = vadd.f32 %v78, %v117
    %v122 = vadd.f32 %v79, %v118
    %v123 = vadd.f32 %v80, %v119
    %s124 = sld [smem:[#allocation3 + $0x12]]
    %v125 = vstv %s124
    %v126 = vmul.f32 %v125, %v110
    %v127 = vmul.f32 %v125, %v112
    %v128 = vmul.f32 %v125, %v111
    %v129 = vmul.f32 %v125, %v113
    %v130 = vadd.f32 %v87, %v126
    %v131 = vadd.f32 %v88, %v127
    %v132 = vadd.f32 %v89, %v128
    %v133 = vadd.f32 %v90, %v129
    %s134 = sld [smem:[#allocation3 + $0x22]]
    %v135 = vstv %s134
    %v136 = vmul.f32 %v135, %v110
    %v137 = vmul.f32 %v135, %v112
    %v138 = vmul.f32 %v135, %v111
    %v139 = vmul.f32 %v135, %v113
    %v140 = vadd.f32 %v97, %v136
    %v141 = vadd.f32 %v98, %v137
    %v142 = vadd.f32 %v99, %v138
    %v143 = vadd.f32 %v100, %v139
    %144 = vrot.lane.b32.xlu0 %v28, 125
    %v145 = vpop.permute.xlu0 %144
    %146 = vrot.lane.b32.xlu0 %v30, 125
    %v147 = vpop.permute.xlu0 %146
    %148 = vrot.lane.b32.xlu0 %v29, 125
    %v149 = vpop.permute.xlu0 %148
    %150 = vrot.lane.b32.xlu0 %v31, 125
    %v151 = vpop.permute.xlu0 %150
    %vm152 = vcmp.lt.s32.totalorder %v65, 125
    %v153 = vsel %vm152, %v145, %v149
    %v154 = vsel %vm152, %v147, %v151
    %v155 = vsel %vm152, %v149, %v145
    %v156 = vsel %vm152, %v151, %v147
    %s157 = sld [smem:[#allocation3 + $0x3]]
    %v158 = vstv %s157
    %v159 = vmul.f32 %v158, %v153
    %v160 = vmul.f32 %v158, %v155
    %v161 = vmul.f32 %v158, %v154
    %v162 = vmul.f32 %v158, %v156
    %v163 = vadd.f32 %v120, %v159
    %v164 = vadd.f32 %v121, %v160
    %v165 = vadd.f32 %v122, %v161
    %v166 = vadd.f32 %v123, %v162
    %s167 = sld [smem:[#allocation3 + $0x13]]
    %v168 = vstv %s167
    %v169 = vmul.f32 %v168, %v153
    %v170 = vmul.f32 %v168, %v155
    %v171 = vmul.f32 %v168, %v154
    %v172 = vmul.f32 %v168, %v156
    %v173 = vadd.f32 %v130, %v169
    %v174 = vadd.f32 %v131, %v170
    %v175 = vadd.f32 %v132, %v171
    %v176 = vadd.f32 %v133, %v172
    %s177 = sld [smem:[#allocation3 + $0x23]]
    %v178 = vstv %s177
    %v179 = vmul.f32 %v178, %v153
    %v180 = vmul.f32 %v178, %v155
    %v181 = vmul.f32 %v178, %v154
    %v182 = vmul.f32 %v178, %v156
    %v183 = vadd.f32 %v140, %v179
    %v184 = vadd.f32 %v141, %v180
    %v185 = vadd.f32 %v142, %v181
    %v186 = vadd.f32 %v143, %v182
    %187 = vrot.lane.b32.xlu0 %v28, 112
    %v188 = vpop.permute.xlu0 %187
    %189 = vrot.lane.b32.xlu0 %v30, 112
    %v190 = vpop.permute.xlu0 %189
    %191 = vrot.lane.b32.xlu0 %v29, 112
    %v192 = vpop.permute.xlu0 %191
    %193 = vrot.lane.b32.xlu0 %v31, 112
    %v194 = vpop.permute.xlu0 %193
    %vm195 = vcmp.lt.s32.totalorder %v65, 112
    %v196 = vsel %vm195, %v188, %v192
    %v197 = vsel %vm195, %v190, %v194
    %v198 = vsel %vm195, %v192, %v188
    %v199 = vsel %vm195, %v194, %v190
    %s200 = sld [smem:[#allocation3 + $0x4]]
    %v201 = vstv %s200
    %v202 = vmul.f32 %v201, %v196
    %v203 = vmul.f32 %v201, %v198
    %v204 = vmul.f32 %v201, %v197
    %v205 = vmul.f32 %v201, %v199
    %v206 = vadd.f32 %v163, %v202
    %v207 = vadd.f32 %v164, %v203
    %v208 = vadd.f32 %v165, %v204
    %v209 = vadd.f32 %v166, %v205
    %s210 = sld [smem:[#allocation3 + $0x14]]
    %v211 = vstv %s210
    %v212 = vmul.f32 %v211, %v196
    %v213 = vmul.f32 %v211, %v198
    %v214 = vmul.f32 %v211, %v197
    %v215 = vmul.f32 %v211, %v199
    %v216 = vadd.f32 %v173, %v212
    %v217 = vadd.f32 %v174, %v213
    %v218 = vadd.f32 %v175, %v214
    %v219 = vadd.f32 %v176, %v215
    %s220 = sld [smem:[#allocation3 + $0x24]]
    %v221 = vstv %s220
    %v222 = vmul.f32 %v221, %v196
    %v223 = vmul.f32 %v221, %v198
    %v224 = vmul.f32 %v221, %v197
    %v225 = vmul.f32 %v221, %v199
    %v226 = vadd.f32 %v183, %v222
    %v227 = vadd.f32 %v184, %v223
    %v228 = vadd.f32 %v185, %v224
    %v229 = vadd.f32 %v186, %v225
    %230 = vrot.lane.b32.xlu0 %v28, 111
    %v231 = vpop.permute.xlu0 %230
    %232 = vrot.lane.b32.xlu0 %v30, 111
    %v233 = vpop.permute.xlu0 %232
    %234 = vrot.lane.b32.xlu0 %v29, 111
    %v235 = vpop.permute.xlu0 %234
    %236 = vrot.lane.b32.xlu0 %v31, 111
    %v237 = vpop.permute.xlu0 %236
    %vm238 = vcmp.lt.s32.totalorder %v65, 111
    %v239 = vsel %vm238, %v231, %v235
    %v240 = vsel %vm238, %v233, %v237
    %v241 = vsel %vm238, %v235, %v231
    %v242 = vsel %vm238, %v237, %v233
    %s243 = sld [smem:[#allocation3 + $0x5]]
    %v244 = vstv %s243
    %v245 = vmul.f32 %v244, %v239
    %v246 = vmul.f32 %v244, %v241
    %v247 = vmul.f32 %v244, %v240
    %v248 = vmul.f32 %v244, %v242
    %v249 = vadd.f32 %v206, %v245
    %v250 = vadd.f32 %v207, %v246
    %v251 = vadd.f32 %v208, %v247
    %v252 = vadd.f32 %v209, %v248
    %s253 = sld [smem:[#allocation3 + $0x15]]
    %v254 = vstv %s253
    %v255 = vmul.f32 %v254, %v239
    %v256 = vmul.f32 %v254, %v241
    %v257 = vmul.f32 %v254, %v240
    %v258 = vmul.f32 %v254, %v242
    %v259 = vadd.f32 %v216, %v255
    %v260 = vadd.f32 %v217, %v256
    %v261 = vadd.f32 %v218, %v257
    %v262 = vadd.f32 %v219, %v258
    %s263 = sld [smem:[#allocation3 + $0x25]]
    %v264 = vstv %s263
    %v265 = vmul.f32 %v264, %v239
    %v266 = vmul.f32 %v264, %v241
    %v267 = vmul.f32 %v264, %v240
    %v268 = vmul.f32 %v264, %v242
    %v269 = vadd.f32 %v226, %v265
    %v270 = vadd.f32 %v227, %v266
    %v271 = vadd.f32 %v228, %v267
    %v272 = vadd.f32 %v229, %v268
    %273 = vrot.lane.b32.xlu0 %v28, 110
    %v274 = vpop.permute.xlu0 %273
    %275 = vrot.lane.b32.xlu0 %v30, 110
    %v276 = vpop.permute.xlu0 %275
    %277 = vrot.lane.b32.xlu0 %v29, 110
    %v278 = vpop.permute.xlu0 %277
    %279 = vrot.lane.b32.xlu0 %v31, 110
    %v280 = vpop.permute.xlu0 %279
    %vm281 = vcmp.lt.s32.totalorder %v65, 110
    %v282 = vsel %vm281, %v274, %v278
    %v283 = vsel %vm281, %v276, %v280
    %v284 = vsel %vm281, %v278, %v274
    %v285 = vsel %vm281, %v280, %v276
    %s286 = sld [smem:[#allocation3 + $0x6]]
    %v287 = vstv %s286
    %v288 = vmul.f32 %v287, %v282
    %v289 = vmul.f32 %v287, %v284
    %v290 = vmul.f32 %v287, %v283
    %v291 = vmul.f32 %v287, %v285
    %v292 = vadd.f32 %v249, %v288
    %v293 = vadd.f32 %v250, %v289
    %v294 = vadd.f32 %v251, %v290
    %v295 = vadd.f32 %v252, %v291
    %s296 = sld [smem:[#allocation3 + $0x16]]
    %v297 = vstv %s296
    %v298 = vmul.f32 %v297, %v282
    %v299 = vmul.f32 %v297, %v284
    %v300 = vmul.f32 %v297, %v283
    %v301 = vmul.f32 %v297, %v285
    %v302 = vadd.f32 %v259, %v298
    %v303 = vadd.f32 %v260, %v299
    %v304 = vadd.f32 %v261, %v300
    %v305 = vadd.f32 %v262, %v301
    %s306 = sld [smem:[#allocation3 + $0x26]]
    %v307 = vstv %s306
    %v308 = vmul.f32 %v307, %v282
    %v309 = vmul.f32 %v307, %v284
    %v310 = vmul.f32 %v307, %v283
    %v311 = vmul.f32 %v307, %v285
    %v312 = vadd.f32 %v269, %v308
    %v313 = vadd.f32 %v270, %v309
    %v314 = vadd.f32 %v271, %v310
    %v315 = vadd.f32 %v272, %v311
    %316 = vrot.lane.b32.xlu0 %v28, 109
    %v317 = vpop.permute.xlu0 %316
    %318 = vrot.lane.b32.xlu0 %v30, 109
    %v319 = vpop.permute.xlu0 %318
    %320 = vrot.lane.b32.xlu0 %v29, 109
    %v321 = vpop.permute.xlu0 %320
    %322 = vrot.lane.b32.xlu0 %v31, 109
    %v323 = vpop.permute.xlu0 %322
    %vm324 = vcmp.lt.s32.totalorder %v65, 109
    %v325 = vsel %vm324, %v317, %v321
    %v326 = vsel %vm324, %v319, %v323
    %v327 = vsel %vm324, %v321, %v317
    %v328 = vsel %vm324, %v323, %v319
    %s329 = sld [smem:[#allocation3 + $0x7]]
    %v330 = vstv %s329
    %v331 = vmul.f32 %v330, %v325
    %v332 = vmul.f32 %v330, %v327
    %v333 = vmul.f32 %v330, %v326
    %v334 = vmul.f32 %v330, %v328
    %v335 = vadd.f32 %v292, %v331
    %v336 = vadd.f32 %v293, %v332
    %v337 = vadd.f32 %v294, %v333
    %v338 = vadd.f32 %v295, %v334
    %s339 = sld [smem:[#allocation3 + $0x17]]
    %v340 = vstv %s339
    %v341 = vmul.f32 %v340, %v325
    %v342 = vmul.f32 %v340, %v327
    %v343 = vmul.f32 %v340, %v326
    %v344 = vmul.f32 %v340, %v328
    %v345 = vadd.f32 %v302, %v341
    %v346 = vadd.f32 %v303, %v342
    %v347 = vadd.f32 %v304, %v343
    %v348 = vadd.f32 %v305, %v344
    %s349 = sld [smem:[#allocation3 + $0x27]]
    %v350 = vstv %s349
    %v351 = vmul.f32 %v350, %v325
    %v352 = vmul.f32 %v350, %v327
    %v353 = vmul.f32 %v350, %v326
    %v354 = vmul.f32 %v350, %v328
    %v355 = vadd.f32 %v312, %v351
    %v356 = vadd.f32 %v313, %v352
    %v357 = vadd.f32 %v314, %v353
    %v358 = vadd.f32 %v315, %v354
    %359 = vrot.lane.b32.xlu0 %v28, 96
    %v360 = vpop.permute.xlu0 %359
    %361 = vrot.lane.b32.xlu0 %v30, 96
    %v362 = vpop.permute.xlu0 %361
    %363 = vrot.lane.b32.xlu0 %v29, 96
    %v364 = vpop.permute.xlu0 %363
    %365 = vrot.lane.b32.xlu0 %v31, 96
    %v366 = vpop.permute.xlu0 %365
    %vm367 = vcmp.lt.s32.totalorder %v65, 96
    %v368 = vsel %vm367, %v360, %v364
    %v369 = vsel %vm367, %v362, %v366
    %v370 = vsel %vm367, %v364, %v360
    %v371 = vsel %vm367, %v366, %v362
    %s372 = sld [smem:[#allocation3 + $0x8]]
    %v373 = vstv %s372
    %v374 = vmul.f32 %v373, %v368
    %v375 = vmul.f32 %v373, %v370
    %v376 = vmul.f32 %v373, %v369
    %v377 = vmul.f32 %v373, %v371
    %v378 = vadd.f32 %v335, %v374
    %v379 = vadd.f32 %v336, %v375
    %v380 = vadd.f32 %v337, %v376
    %v381 = vadd.f32 %v338, %v377
    %s382 = sld [smem:[#allocation3 + $0x18]]
    %v383 = vstv %s382
    %v384 = vmul.f32 %v383, %v368
    %v385 = vmul.f32 %v383, %v370
    %v386 = vmul.f32 %v383, %v369
    %v387 = vmul.f32 %v383, %v371
    %v388 = vadd.f32 %v345, %v384
    %v389 = vadd.f32 %v346, %v385
    %v390 = vadd.f32 %v347, %v386
    %v391 = vadd.f32 %v348, %v387
    %s392 = sld [smem:[#allocation3 + $0x28]]
    %v393 = vstv %s392
    %v394 = vmul.f32 %v393, %v368
    %v395 = vmul.f32 %v393, %v370
    %v396 = vmul.f32 %v393, %v369
    %v397 = vmul.f32 %v393, %v371
    %v398 = vadd.f32 %v355, %v394
    %v399 = vadd.f32 %v356, %v395
    %v400 = vadd.f32 %v357, %v396
    %v401 = vadd.f32 %v358, %v397
    %402 = vrot.lane.b32.xlu0 %v28, 95
    %v403 = vpop.permute.xlu0 %402
    %404 = vrot.lane.b32.xlu0 %v30, 95
    %v405 = vpop.permute.xlu0 %404
    %406 = vrot.lane.b32.xlu0 %v29, 95
    %v407 = vpop.permute.xlu0 %406
    %408 = vrot.lane.b32.xlu0 %v31, 95
    %v409 = vpop.permute.xlu0 %408
    %vm410 = vcmp.lt.s32.totalorder %v65, 95
    %v411 = vsel %vm410, %v403, %v407
    %v412 = vsel %vm410, %v405, %v409
    %v413 = vsel %vm410, %v407, %v403
    %v414 = vsel %vm410, %v409, %v405
    %s415 = sld [smem:[#allocation3 + $0x9]]
    %v416 = vstv %s415
    %v417 = vmul.f32 %v416, %v411
    %v418 = vmul.f32 %v416, %v413
    %v419 = vmul.f32 %v416, %v412
    %v420 = vmul.f32 %v416, %v414
    %v421 = vadd.f32 %v378, %v417
    %v422 = vadd.f32 %v379, %v418
    %v423 = vadd.f32 %v380, %v419
    %v424 = vadd.f32 %v381, %v420
    %s425 = sld [smem:[#allocation3 + $0x19]]
    %v426 = vstv %s425
    %v427 = vmul.f32 %v426, %v411
    %v428 = vmul.f32 %v426, %v413
    %v429 = vmul.f32 %v426, %v412
    %v430 = vmul.f32 %v426, %v414
    %v431 = vadd.f32 %v388, %v427
    %v432 = vadd.f32 %v389, %v428
    %v433 = vadd.f32 %v390, %v429
    %v434 = vadd.f32 %v391, %v430
    %s435 = sld [smem:[#allocation3 + $0x29]]
    %v436 = vstv %s435
    %v437 = vmul.f32 %v436, %v411
    %v438 = vmul.f32 %v436, %v413
    %v439 = vmul.f32 %v436, %v412
    %v440 = vmul.f32 %v436, %v414
    %v441 = vadd.f32 %v398, %v437
    %v442 = vadd.f32 %v399, %v438
    %v443 = vadd.f32 %v400, %v439
    %v444 = vadd.f32 %v401, %v440
    %445 = vrot.lane.b32.xlu0 %v28, 94
    %v446 = vpop.permute.xlu0 %445
    %447 = vrot.lane.b32.xlu0 %v30, 94
    %v448 = vpop.permute.xlu0 %447
    %449 = vrot.lane.b32.xlu0 %v29, 94
    %v450 = vpop.permute.xlu0 %449
    %451 = vrot.lane.b32.xlu0 %v31, 94
    %v452 = vpop.permute.xlu0 %451
    %vm453 = vcmp.lt.s32.totalorder %v65, 94
    %v454 = vsel %vm453, %v446, %v450
    %v455 = vsel %vm453, %v448, %v452
    %v456 = vsel %vm453, %v450, %v446
    %v457 = vsel %vm453, %v452, %v448
    %s458 = sld [smem:[#allocation3 + $0xa]]
    %v459 = vstv %s458
    %v460 = vmul.f32 %v459, %v454
    %v461 = vmul.f32 %v459, %v456
    %v462 = vmul.f32 %v459, %v455
    %v463 = vmul.f32 %v459, %v457
    %v464 = vadd.f32 %v421, %v460
    %v465 = vadd.f32 %v422, %v461
    %v466 = vadd.f32 %v423, %v462
    %v467 = vadd.f32 %v424, %v463
    %s468 = sld [smem:[#allocation3 + $0x1a]]
    %v469 = vstv %s468
    %v470 = vmul.f32 %v469, %v454
    %v471 = vmul.f32 %v469, %v456
    %v472 = vmul.f32 %v469, %v455
    %v473 = vmul.f32 %v469, %v457
    %v474 = vadd.f32 %v431, %v470
    %v475 = vadd.f32 %v432, %v471
    %v476 = vadd.f32 %v433, %v472
    %v477 = vadd.f32 %v434, %v473
    %s478 = sld [smem:[#allocation3 + $0x2a]]
    %v479 = vstv %s478
    %v480 = vmul.f32 %v479, %v454
    %v481 = vmul.f32 %v479, %v456
    %v482 = vmul.f32 %v479, %v455
    %v483 = vmul.f32 %v479, %v457
    %v484 = vadd.f32 %v441, %v480
    %v485 = vadd.f32 %v442, %v481
    %v486 = vadd.f32 %v443, %v482
    %v487 = vadd.f32 %v444, %v483
    %488 = vrot.lane.b32.xlu0 %v28, 93
    %v489 = vpop.permute.xlu0 %488
    %490 = vrot.lane.b32.xlu0 %v30, 93
    %v491 = vpop.permute.xlu0 %490
    %492 = vrot.lane.b32.xlu0 %v29, 93
    %v493 = vpop.permute.xlu0 %492
    %494 = vrot.lane.b32.xlu0 %v31, 93
    %v495 = vpop.permute.xlu0 %494
    %vm496 = vcmp.lt.s32.totalorder %v65, 93
    %v497 = vsel %vm496, %v489, %v493
    %v498 = vsel %vm496, %v491, %v495
    %v499 = vsel %vm496, %v493, %v489
    %v500 = vsel %vm496, %v495, %v491
    %s501 = sld [smem:[#allocation3 + $0xb]]
    %v502 = vstv %s501
    %v503 = vmul.f32 %v502, %v497
    %v504 = vmul.f32 %v502, %v499
    %v505 = vmul.f32 %v502, %v498
    %v506 = vmul.f32 %v502, %v500
    %v507 = vadd.f32 %v464, %v503
    %v508 = vadd.f32 %v465, %v504
    %v509 = vadd.f32 %v466, %v505
    %v510 = vadd.f32 %v467, %v506
    %s511 = sld [smem:[#allocation3 + $0x1b]]
    %v512 = vstv %s511
    %v513 = vmul.f32 %v512, %v497
    %v514 = vmul.f32 %v512, %v499
    %v515 = vmul.f32 %v512, %v498
    %v516 = vmul.f32 %v512, %v500
    %v517 = vadd.f32 %v474, %v513
    %v518 = vadd.f32 %v475, %v514
    %v519 = vadd.f32 %v476, %v515
    %v520 = vadd.f32 %v477, %v516
    %s521 = sld [smem:[#allocation3 + $0x2b]]
    %v522 = vstv %s521
    %v523 = vmul.f32 %v522, %v497
    %v524 = vmul.f32 %v522, %v499
    %v525 = vmul.f32 %v522, %v498
    %v526 = vmul.f32 %v522, %v500
    %v527 = vadd.f32 %v484, %v523
    %v528 = vadd.f32 %v485, %v524
    %v529 = vadd.f32 %v486, %v525
    %v530 = vadd.f32 %v487, %v526
    %531 = vrot.lane.b32.xlu0 %v28, 80
    %v532 = vpop.permute.xlu0 %531
    %533 = vrot.lane.b32.xlu0 %v30, 80
    %v534 = vpop.permute.xlu0 %533
    %535 = vrot.lane.b32.xlu0 %v29, 80
    %v536 = vpop.permute.xlu0 %535
    %537 = vrot.lane.b32.xlu0 %v31, 80
    %v538 = vpop.permute.xlu0 %537
    %vm539 = vcmp.lt.s32.totalorder %v65, 80
    %v540 = vsel %vm539, %v532, %v536
    %v541 = vsel %vm539, %v534, %v538
    %v542 = vsel %vm539, %v536, %v532
    %v543 = vsel %vm539, %v538, %v534
    %s544 = sld [smem:[#allocation3 + $0xc]]
    %v545 = vstv %s544
    %v546 = vmul.f32 %v545, %v540
    %v547 = vmul.f32 %v545, %v542
    %v548 = vmul.f32 %v545, %v541
    %v549 = vmul.f32 %v545, %v543
    %v550 = vadd.f32 %v507, %v546
    %v551 = vadd.f32 %v508, %v547
    %v552 = vadd.f32 %v509, %v548
    %v553 = vadd.f32 %v510, %v549
    %s554 = sld [smem:[#allocation3 + $0x1c]]
    %v555 = vstv %s554
    %v556 = vmul.f32 %v555, %v540
    %v557 = vmul.f32 %v555, %v542
    %v558 = vmul.f32 %v555, %v541
    %v559 = vmul.f32 %v555, %v543
    %v560 = vadd.f32 %v517, %v556
    %v561 = vadd.f32 %v518, %v557
    %v562 = vadd.f32 %v519, %v558
    %v563 = vadd.f32 %v520, %v559
    %s564 = sld [smem:[#allocation3 + $0x2c]]
    %v565 = vstv %s564
    %v566 = vmul.f32 %v565, %v540
    %v567 = vmul.f32 %v565, %v542
    %v568 = vmul.f32 %v565, %v541
    %v569 = vmul.f32 %v565, %v543
    %v570 = vadd.f32 %v527, %v566
    %v571 = vadd.f32 %v528, %v567
    %v572 = vadd.f32 %v529, %v568
    %v573 = vadd.f32 %v530, %v569
    %574 = vrot.lane.b32.xlu0 %v28, 79
    %v575 = vpop.permute.xlu0 %574
    %576 = vrot.lane.b32.xlu0 %v30, 79
    %v577 = vpop.permute.xlu0 %576
    %578 = vrot.lane.b32.xlu0 %v29, 79
    %v579 = vpop.permute.xlu0 %578
    %580 = vrot.lane.b32.xlu0 %v31, 79
    %v581 = vpop.permute.xlu0 %580
    %vm582 = vcmp.lt.s32.totalorder %v65, 79
    %v583 = vsel %vm582, %v575, %v579
    %v584 = vsel %vm582, %v577, %v581
    %v585 = vsel %vm582, %v579, %v575
    %v586 = vsel %vm582, %v581, %v577
    %s587 = sld [smem:[#allocation3 + $0xd]]
    %v588 = vstv %s587
    %v589 = vmul.f32 %v588, %v583
    %v590 = vmul.f32 %v588, %v585
    %v591 = vmul.f32 %v588, %v584
    %v592 = vmul.f32 %v588, %v586
    %v593 = vadd.f32 %v550, %v589
    %v594 = vadd.f32 %v551, %v590
    %v595 = vadd.f32 %v552, %v591
    %v596 = vadd.f32 %v553, %v592
    %s597 = sld [smem:[#allocation3 + $0x1d]]
    %v598 = vstv %s597
    %v599 = vmul.f32 %v598, %v583
    %v600 = vmul.f32 %v598, %v585
    %v601 = vmul.f32 %v598, %v584
    %v602 = vmul.f32 %v598, %v586
    %v603 = vadd.f32 %v560, %v599
    %v604 = vadd.f32 %v561, %v600
    %v605 = vadd.f32 %v562, %v601
    %v606 = vadd.f32 %v563, %v602
    %s607 = sld [smem:[#allocation3 + $0x2d]]
    %v608 = vstv %s607
    %v609 = vmul.f32 %v608, %v583
    %v610 = vmul.f32 %v608, %v585
    %v611 = vmul.f32 %v608, %v584
    %v612 = vmul.f32 %v608, %v586
    %v613 = vadd.f32 %v570, %v609
    %v614 = vadd.f32 %v571, %v610
    %v615 = vadd.f32 %v572, %v611
    %v616 = vadd.f32 %v573, %v612
    %617 = vrot.lane.b32.xlu0 %v28, 78
    %v618 = vpop.permute.xlu0 %617
    %619 = vrot.lane.b32.xlu0 %v30, 78
    %v620 = vpop.permute.xlu0 %619
    %621 = vrot.lane.b32.xlu0 %v29, 78
    %v622 = vpop.permute.xlu0 %621
    %623 = vrot.lane.b32.xlu0 %v31, 78
    %v624 = vpop.permute.xlu0 %623
    %vm625 = vcmp.lt.s32.totalorder %v65, 78
    %v626 = vsel %vm625, %v618, %v622
    %v627 = vsel %vm625, %v620, %v624
    %v628 = vsel %vm625, %v622, %v618
    %v629 = vsel %vm625, %v624, %v620
    %s630 = sld [smem:[#allocation3 + $0xe]]
    %v631 = vstv %s630
    %v632 = vmul.f32 %v631, %v626
    %v633 = vmul.f32 %v631, %v628
    %v634 = vmul.f32 %v631, %v627
    %v635 = vmul.f32 %v631, %v629
    %v636 = vadd.f32 %v593, %v632
    %v637 = vadd.f32 %v594, %v633
    %v638 = vadd.f32 %v595, %v634
    %v639 = vadd.f32 %v596, %v635
    %s640 = sld [smem:[#allocation3 + $0x1e]]
    %v641 = vstv %s640
    %v642 = vmul.f32 %v641, %v626
    %v643 = vmul.f32 %v641, %v628
    %v644 = vmul.f32 %v641, %v627
    %v645 = vmul.f32 %v641, %v629
    %v646 = vadd.f32 %v603, %v642
    %v647 = vadd.f32 %v604, %v643
    %v648 = vadd.f32 %v605, %v644
    %v649 = vadd.f32 %v606, %v645
    %s650 = sld [smem:[#allocation3 + $0x2e]]
    %v651 = vstv %s650
    %v652 = vmul.f32 %v651, %v626
    %v653 = vmul.f32 %v651, %v628
    %v654 = vmul.f32 %v651, %v627
    %v655 = vmul.f32 %v651, %v629
    %v656 = vadd.f32 %v613, %v652
    %v657 = vadd.f32 %v614, %v653
    %v658 = vadd.f32 %v615, %v654
    %v659 = vadd.f32 %v616, %v655
    %660 = vrot.lane.b32.xlu0 %v28, 77
    %v661 = vpop.permute.xlu0 %660
    %662 = vrot.lane.b32.xlu0 %v30, 77
    %v663 = vpop.permute.xlu0 %662
    %664 = vrot.lane.b32.xlu0 %v29, 77
    %v665 = vpop.permute.xlu0 %664
    %666 = vrot.lane.b32.xlu0 %v31, 77
    %v667 = vpop.permute.xlu0 %666
    %vm668 = vcmp.lt.s32.totalorder %v65, 77
    %v669 = vsel %vm668, %v661, %v665
    %v670 = vsel %vm668, %v663, %v667
    %v671 = vsel %vm668, %v665, %v661
    %v672 = vsel %vm668, %v667, %v663
    %s673 = sld [smem:[#allocation3 + $0xf]]
    %v674 = vstv %s673
    %v675 = vmul.f32 %v674, %v669
    %v676 = vmul.f32 %v674, %v671
    %v677 = vmul.f32 %v674, %v670
    %v678 = vmul.f32 %v674, %v672
    %v679 = vadd.f32 %v636, %v675
    %v680 = vadd.f32 %v637, %v676
    %v681 = vadd.f32 %v638, %v677
    %v682 = vadd.f32 %v639, %v678
    %s683 = sld [smem:[#allocation3 + $0x1f]]
    %v684 = vstv %s683
    %v685 = vmul.f32 %v684, %v669
    %v686 = vmul.f32 %v684, %v671
    %v687 = vmul.f32 %v684, %v670
    %v688 = vmul.f32 %v684, %v672
    %v689 = vadd.f32 %v646, %v685
    %v690 = vadd.f32 %v647, %v686
    %v691 = vadd.f32 %v648, %v687
    %v692 = vadd.f32 %v649, %v688
    %s693 = sld [smem:[#allocation3 + $0x2f]]
    %v694 = vstv %s693
    %v695 = vmul.f32 %v694, %v669
    %v696 = vmul.f32 %v694, %v671
    %v697 = vmul.f32 %v694, %v670
    %v698 = vmul.f32 %v694, %v672
    %v699 = vadd.f32 %v656, %v695
    %v700 = vadd.f32 %v657, %v696
    %v701 = vadd.f32 %v658, %v697
    %v702 = vadd.f32 %v659, %v698
    %v707 = vrot.slane %v689, 1
    %v708 = vrot.slane %v690, 1
    %v709 = vrot.slane %v691, 1
    %v710 = vrot.slane %v692, 1
    %v715 = vadd.f32 %v679, %v707
    %v716 = vadd.f32 %v680, %v708
    %v717 = vadd.f32 %v681, %v709
    %v718 = vadd.f32 %v682, %v710
    %v723 = vrot.slane %v699, 2
    %v724 = vrot.slane %v700, 2
    %v725 = vrot.slane %v701, 2
    %v726 = vrot.slane %v702, 2
    %v731 = vadd.f32 %v715, %v723
    %v732 = vadd.f32 %v716, %v724
    %v733 = vadd.f32 %v717, %v725
    %v734 = vadd.f32 %v718, %v726
    %v735 = vxor.u32 %v731, 2147483648
    %v736 = vxor.u32 %v732, 2147483648
    %v737 = vxor.u32 %v733, 2147483648
    %v738 = vxor.u32 %v734, 2147483648
    %v739 = vmul.f32 %v735, 1.442695
    %v740 = vpow.pop %v739
    %v741 = vmul.f32 %v736, 1.442695
    %v742 = vpow.pop %v741
    %v743 = vmul.f32 %v737, 1.442695
    %v744 = vpow.pop %v743
    %v745 = vmul.f32 %v738, 1.442695
    %v746 = vpow.pop %v745
    %v747 = vadd.f32 %v740, 1.0
    %v748 = vadd.f32 %v742, 1.0
    %v749 = vadd.f32 %v744, 1.0
    %v750 = vadd.f32 %v746, 1.0
    %v751 = vrcp.pop %v747
    %v752 = vmul.f32 %v747, %v751
    %v753 = vsub.f32 1.0, %v752
    %v754 = vmul.f32 %v751, %v753
    %v755 = vadd.f32 %v751, %v754
    %vm756 = vweird.f32 %v747
    %vm757 = vweird.f32 %v751
    %vm758 = vmor %vm756, %vm757
    %v759 = vsel %vm758, %v751, %v755
    %v760 = vand.u32 2147483647, %v747
    %vm761 = vcmp.eq.f32.partialorder %v760, 8.507059e+37
    %v762 = vand.u32 %v747, 2147483648
    %v763 = vor.u32 1.1754944e-38, %v762
    %v764 = vsel %vm761, %v763, %v759
    %v765 = vmul.f32 1.0, %v764
    %v766 = vrcp.pop %v748
    %v767 = vmul.f32 %v748, %v766
    %v768 = vsub.f32 1.0, %v767
    %v769 = vmul.f32 %v766, %v768
    %v770 = vadd.f32 %v766, %v769
    %vm771 = vweird.f32 %v748
    %vm772 = vweird.f32 %v766
    %vm773 = vmor %vm771, %vm772
    %v774 = vsel %vm773, %v766, %v770
    %v775 = vand.u32 2147483647, %v748
    %vm776 = vcmp.eq.f32.partialorder %v775, 8.507059e+37
    %v777 = vand.u32 %v748, 2147483648
    %v778 = vor.u32 1.1754944e-38, %v777
    %v779 = vsel %vm776, %v778, %v774
    %v780 = vmul.f32 1.0, %v779
    %v781 = vrcp.pop %v749
    %v782 = vmul.f32 %v749, %v781
    %v783 = vsub.f32 1.0, %v782
    %v784 = vmul.f32 %v781, %v783
    %v785 = vadd.f32 %v781, %v784
    %vm786 = vweird.f32 %v749
    %vm787 = vweird.f32 %v781
    %vm788 = vmor %vm786, %vm787
    %v789 = vsel %vm788, %v781, %v785
    %v790 = vand.u32 2147483647, %v749
    %vm791 = vcmp.eq.f32.partialorder %v790, 8.507059e+37
    %v792 = vand.u32 %v749, 2147483648
    %v793 = vor.u32 1.1754944e-38, %v792
    %v794 = vsel %vm791, %v793, %v789
    %v795 = vmul.f32 1.0, %v794
    %v796 = vrcp.pop %v750
    %v797 = vmul.f32 %v750, %v796
    %v798 = vsub.f32 1.0, %v797
    %v799 = vmul.f32 %v796, %v798
    %v800 = vadd.f32 %v796, %v799
    %vm801 = vweird.f32 %v750
    %vm802 = vweird.f32 %v796
    %vm803 = vmor %vm801, %vm802
    %v804 = vsel %vm803, %v796, %v800
    %v805 = vand.u32 2147483647, %v750
    %vm806 = vcmp.eq.f32.partialorder %v805, 8.507059e+37
    %v807 = vand.u32 %v750, 2147483648
    %v808 = vor.u32 1.1754944e-38, %v807
    %v809 = vsel %vm806, %v808, %v804
    %v810 = vmul.f32 1.0, %v809
    %811 = vst [vmem:[%s3] sm:$0x3f] %v765
    %812 = vst [vmem:[%s3 + $0x8] sm:$0x3f] %v780
    %813 = vst [vmem:[%s3 + $0x10] sm:$0x3f] %v795
    %814 = vst [vmem:[%s3 + $0x18] sm:$0x3f] %v810
    // Predicated region
    $region18: #{template_matcher_3d.1} parent=1 // pred_check
      _
    $region19: #{template_matcher_3d.1} parent=1 // pred_check_branch
      %816 = sbr.rel (0) target = $region21
    $region20: #{template_matcher_3d.1} parent=1 // pred_region
      _
    $region21: #{template_matcher_3d.1} parent=1 // pred_fallthru
      _
    // Predicated region
    $region22: #{template_matcher_3d.1} parent=1 // pred_check
      _
    $region23: #{template_matcher_3d.1} parent=1 // pred_check_branch
      %818 = sbr.rel (0) target = $region25
    $region24: #{template_matcher_3d.1} parent=1 // pred_region
      _
    $region25: #{template_matcher_3d.1} parent=1 // pred_fallthru
      _
    %819 = vsyncpa [#allocation4], 1

</llo_original>
